<compile_context>
chip_gen: v7x
topology: tpu7x:2x2x1
jax: 0.10.0
libtpu: 0.0.40
codegen_flags: <defaults>
</compile_context>

<pallas_src>
import functools

import jax
import jax.numpy as jnp
from jax.experimental import pallas as pl
from jax.experimental.pallas import tpu as pltpu

NEG_SLOPE = 0.01  # F.leaky_relu default


def _leaky_relu(v):
    # max(v, a*v) == leaky_relu(v) for 0 < a < 1: 2 VALU ops instead of 3.
    return jnp.maximum(v, NEG_SLOPE * v)


def fe_kernel(x_ref, w1_ref, w2_ref, b2_ref, out_ref, *, act_dtype):
    """One batch tile.

    x_ref : (TB, in_dim+1)  -- last column is ones (bias fold)
    w1_ref: (in_dim+1, H)   -- last row is b1
    w2_ref: (H, out_dim)
    b2_ref: (1, out_dim) f32
    """
    # Layer 1: bias already folded into the matmul. Pop the MXU result directly
    # in act_dtype (bf16 on v6e/v7x, f32 on v5e) so the activation runs packed.
    h = jnp.dot(x_ref[...], w1_ref[...], preferred_element_type=act_dtype)
    h = _leaky_relu(h)
    h = h.astype(w2_ref.dtype)          # no-op when act_dtype == compute dtype
    # Layer 2: tiny N=16 output; keep bias + activation in f32 on all chips.
    o = jnp.dot(h, w2_ref[...], preferred_element_type=jnp.float32)
    o = _leaky_relu(o + b2_ref[...])
    out_ref[...] = o.astype(out_ref.dtype)


def _round_up(n, m):
    return ((n + m - 1) // m) * m


def _act_dtype_for_device(compute_dtype):
    """bf16 activations only where the VPU is bf16-native (v6e/v7x)."""
    if jnp.dtype(compute_dtype) == jnp.dtype(jnp.float32):
        return jnp.float32
    try:
        kind = jax.devices()[0].device_kind.lower()
    except Exception:
        return jnp.float32
    for old in ("v2", "v3", "v4", "v5"):
        if old in kind:
            return jnp.float32  # no bf16 VALU on these generations
    return jnp.bfloat16


@functools.partial(jax.jit, static_argnames=("block_b", "compute_dtype"))
def fe_forward(x, w1, b1, w2, b2, *, block_b=2048, compute_dtype=jnp.bfloat16):
    """x: (B, in_dim); w1: (in_dim, H); b1: (1, H); w2: (H, out_dim); b2: (1, out_dim).

    block_b:       max batch-tile size (rounded to a multiple of 8 internally).
    compute_dtype: MXU operand dtype; accumulation is always f32.
                   Use jnp.float32 for exact f32 semantics.
    """
    B, in_dim = x.shape
    H, out_dim = w2.shape
    out_dtype = x.dtype
    act_dtype = _act_dtype_for_device(compute_dtype)

    # ---- adaptive batch tiling ---------------------------------------------
    b8 = _round_up(B, 8)
    tb_cap = max(8, min((int(block_b) // 8) * 8, b8))  # multiple of 8, <= block_b
    num_tiles = -(-b8 // tb_cap)
    if num_tiles > 1 and num_tiles % 2:
        num_tiles += 1  # even tile count -> balanced across v7x's two TensorCores
    tb = _round_up(-(-b8 // num_tiles), 8)
    bp = num_tiles * tb

    # ---- single fused pad+convert of x: batch pad + ones column (bias fold) --
    # Pad value 1.0 provides the bias column; the padded batch rows are sliced off.
    xp = jnp.pad(x, ((0, bp - B), (0, 1)), constant_values=1.0).astype(compute_dtype)
    w1_aug = jnp.concatenate([w1, b1.reshape(1, H)], axis=0).astype(compute_dtype)
    w2c = w2.astype(compute_dtype)
    b2f = b2.reshape(1, out_dim).astype(jnp.float32)

    k = in_dim + 1
    cbytes = jnp.dtype(compute_dtype).itemsize
    obytes = jnp.dtype(out_dtype).itemsize
    cost = pl.CostEstimate(
        flops=2 * bp * (k * H + H * out_dim),
        transcendentals=0,
        bytes_accessed=(bp * k + k * H + H * out_dim) * cbytes
        + out_dim * 4
        + bp * out_dim * obytes,
    )

    out = pl.pallas_call(
        functools.partial(fe_kernel, act_dtype=act_dtype),
        out_shape=jax.ShapeDtypeStruct((bp, out_dim), out_dtype),
        grid=(num_tiles,),
        in_specs=[
            pl.BlockSpec((tb, k), lambda i: (i, 0)),        # x tile (pipelined)
            pl.BlockSpec((k, H), lambda i: (0, 0)),         # w1+b1 (VMEM resident)
            pl.BlockSpec((H, out_dim), lambda i: (0, 0)),   # w2    (VMEM resident)
            pl.BlockSpec((1, out_dim), lambda i: (0, 0)),   # b2    (VMEM resident)
        ],
        out_specs=pl.BlockSpec((tb, out_dim), lambda i: (i, 0)),
        compiler_params=pltpu.CompilerParams(
            # Independent batch tiles -> shard across v7x's two TensorCores.
            dimension_semantics=("parallel",),
            # Footprint at tb=2048 is a few MiB; 32 MiB is safe on v5e/v6e/v7x.
            vmem_limit_bytes=32 * 1024 * 1024,
        ),
        cost_estimate=cost,
    )(xp, w1_aug, w2c, b2f)

    return out[:B] if bp != B else out


def init_params(key, in_dim=10, H=512, out_dim=16, dtype=jnp.float32):
    """Deterministic synthetic params (PyTorch-style uniform fan-in init)."""
    k1, k2, k3, k4 = jax.random.split(key, 4)
    bound1 = 1.0 / jnp.sqrt(in_dim)
    bound2 = 1.0 / jnp.sqrt(H)
    w1 = jax.random.uniform(k1, (in_dim, H), dtype, -bound1, bound1)
    b1 = jax.random.uniform(k2, (1, H), dtype, -bound1, bound1)
    w2 = jax.random.uniform(k3, (H, out_dim), dtype, -bound2, bound2)
    b2 = jax.random.uniform(k4, (1, out_dim), dtype, -bound2, bound2)
    return w1, b1, w2, b2


def fe_reference(x, w1, b1, w2, b2):
    h = jax.nn.leaky_relu(x @ w1 + b1, NEG_SLOPE)
    return jax.nn.leaky_relu(h @ w2 + b2, NEG_SLOPE)


if __name__ == "__main__":
    key = jax.random.PRNGKey(0)
    kx, kp = jax.random.split(key)

    B, in_dim, H, out_dim = 8, 10, 512, 16
    x = jax.random.normal(kx, (B, in_dim), jnp.float32)
    w1, b1, w2, b2 = init_params(kp, in_dim, H, out_dim)

    # 1) Exact f32 path (matches the PyTorch module's f32 math).
    out = jax.block_until_ready(fe_forward(x, w1, b1, w2, b2, compute_dtype=jnp.float32))
    ref = fe_reference(x, w1, b1, w2, b2)
    assert out.shape == (B, out_dim) and out.dtype == x.dtype
    assert jnp.allclose(out, ref, atol=1e-5, rtol=1e-5)

    # 2) Default bf16-MXU path, ragged batch, small block_b -> multi-tile grid
    #    (exercises adaptive tiling, even tile count, padding slice-off).
    B2 = 1030
    x2 = jax.random.normal(jax.random.PRNGKey(1), (B2, in_dim), jnp.float32)
    out2 = jax.block_until_ready(fe_forward(x2, w1, b1, w2, b2, block_b=256))
    ref2 = fe_reference(x2, w1, b1, w2, b2)
    assert out2.shape == (B2, out_dim) and out2.dtype == x2.dtype
    assert jnp.allclose(out2, ref2, atol=1e-1, rtol=1e-1)  # bf16 operand tolerance

    # 3) Default tiling (single 1032-row tile for this batch, minimal padding).
    out3 = jax.block_until_ready(fe_forward(x2, w1, b1, w2, b2))
    assert out3.shape == (B2, out_dim)
    assert jnp.allclose(out3, ref2, atol=1e-1, rtol=1e-1)

    print("KERNEL_OK")
</pallas_src>

<mosaic_0001>
module attributes {stable_mosaic.version = 11 : i64} {
  func.func @fe_kernel(%arg0: i32, %arg1: memref<8x11xf32, #tpu.memory_space<vmem>>, %arg2: memref<11x512xf32, #tpu.memory_space<vmem>>, %arg3: memref<512x16xf32, #tpu.memory_space<vmem>>, %arg4: memref<1x16xf32, #tpu.memory_space<vmem>>, %arg5: memref<8x16xf32, #tpu.memory_space<vmem>>) attributes {dimension_semantics = [#tpu.dimension_semantics<parallel>], iteration_bounds = array<i64: 1>, scalar_prefetch = 0 : i64, scratch_operands = 0 : i64, tpu.core_type = #tpu.core_type<tc>, window_params = [{transform_indices = @transform_0, window_bounds = array<i64: 8, 11>}, {pipeline_mode = #tpu.pipeline_mode<synchronous>, transform_indices = @transform_1, window_bounds = array<i64: 11, 512>}, {pipeline_mode = #tpu.pipeline_mode<synchronous>, transform_indices = @transform_2, window_bounds = array<i64: 512, 16>}, {pipeline_mode = #tpu.pipeline_mode<synchronous>, transform_indices = @transform_3, window_bounds = array<i64: 1, 16>}, {transform_indices = @transform_4, window_bounds = array<i64: 8, 16>}]} {
    %c0 = arith.constant 0 : index
    %c0_0 = arith.constant 0 : index
    %0 = vector.load %arg1[%c0, %c0_0] : memref<8x11xf32, #tpu.memory_space<vmem>>, vector<8x11xf32>
    %c0_1 = arith.constant 0 : index
    %c0_2 = arith.constant 0 : index
    %1 = vector.load %arg2[%c0_1, %c0_2] : memref<11x512xf32, #tpu.memory_space<vmem>>, vector<11x512xf32>
    %cst = arith.constant dense<0.000000e+00> : vector<8x512xf32>
    %2 = tpu.matmul %0, %1, %cst {dimension_numbers = #tpu.dot_dimension_numbers<[1], [0], [0], [1], [0, 0, 1, 1], [], []>} : vector<8x11xf32>, vector<11x512xf32>, vector<8x512xf32> -> vector<8x512xf32>
    %cst_3 = arith.constant 0.00999999977 : f32
    %3 = vector.broadcast %cst_3 : f32 to vector<8x512xf32>
    %4 = arith.mulf %3, %2 : vector<8x512xf32>
    %5 = arith.maximumf %2, %4 : vector<8x512xf32>
    %c0_4 = arith.constant 0 : index
    %c0_5 = arith.constant 0 : index
    %6 = vector.load %arg3[%c0_4, %c0_5] : memref<512x16xf32, #tpu.memory_space<vmem>>, vector<512x16xf32>
    %cst_6 = arith.constant dense<0.000000e+00> : vector<8x16xf32>
    %7 = tpu.matmul %5, %6, %cst_6 {dimension_numbers = #tpu.dot_dimension_numbers<[1], [0], [0], [1], [0, 0, 1, 1], [], []>} : vector<8x512xf32>, vector<512x16xf32>, vector<8x16xf32> -> vector<8x16xf32>
    %c0_7 = arith.constant 0 : index
    %c0_8 = arith.constant 0 : index
    %8 = vector.load %arg4[%c0_7, %c0_8] : memref<1x16xf32, #tpu.memory_space<vmem>>, vector<1x16xf32>
    %9 = vector.broadcast %8 : vector<1x16xf32> to vector<8x16xf32>
    %10 = arith.addf %7, %9 : vector<8x16xf32>
    %cst_9 = arith.constant 0.00999999977 : f32
    %11 = vector.broadcast %cst_9 : f32 to vector<8x16xf32>
    %12 = arith.mulf %11, %10 : vector<8x16xf32>
    %13 = arith.maximumf %10, %12 : vector<8x16xf32>
    %c0_10 = arith.constant 0 : index
    %c0_11 = arith.constant 0 : index
    %14 = vector.load %arg5[%c0_10, %c0_11] : memref<8x16xf32, #tpu.memory_space<vmem>>, vector<8x16xf32>
    tpu.vector_store %arg5[%c0_10, %c0_11], %13 {strides = array<i32>} : memref<8x16xf32, #tpu.memory_space<vmem>>, vector<8x16xf32>,
    return
  }
  func.func @transform_0(%arg0: i32) -> (i32, i32) {
    %c0_i32 = arith.constant 0 : i32
    %c0_i32_0 = arith.constant 0 : i32
    return %arg0, %c0_i32 : i32, i32
  }
  func.func @transform_1(%arg0: i32) -> (i32, i32) {
    %c0_i32 = arith.constant 0 : i32
    %c0_i32_0 = arith.constant 0 : i32
    %c0_i32_1 = arith.constant 0 : i32
    return %c0_i32, %c0_i32_0 : i32, i32
  }
  func.func @transform_2(%arg0: i32) -> (i32, i32) {
    %c0_i32 = arith.constant 0 : i32
    %c0_i32_0 = arith.constant 0 : i32
    %c0_i32_1 = arith.constant 0 : i32
    return %c0_i32, %c0_i32_0 : i32, i32
  }
  func.func @transform_3(%arg0: i32) -> (i32, i32) {
    %c0_i32 = arith.constant 0 : i32
    %c0_i32_0 = arith.constant 0 : i32
    %c0_i32_1 = arith.constant 0 : i32
    return %c0_i32, %c0_i32_0 : i32, i32
  }
  func.func @transform_4(%arg0: i32) -> (i32, i32) {
    %c0_i32 = arith.constant 0 : i32
    %c0_i32_0 = arith.constant 0 : i32
    return %arg0, %c0_i32 : i32, i32
  }
}

</mosaic_0001>

<llo_original>
// kernel: fe_forward.1
$region0: #{fe_forward.1}
  #allocation0 [shape = 'u32[]', space=smem, size = 0x4, offset = 0x4, fixed_abs, tag = 'smem constant byte address 0x4 - core index']
  #allocation1 [shape = 'u32[144,128]{1,0:T(1,128)}', space=vmem, size = 0x12000, scoped, tag = 'internal scratch']
  %s0 = inlined_call_operand.vmem [shape: f32[8,11], index: 0, kind: input, shape index: {}]
  %s1 = inlined_call_operand.vmem [shape: f32[11,512], index: 1, kind: input, shape index: {}]
  %s2 = inlined_call_operand.vmem [shape: f32[512,16], index: 2, kind: input, shape index: {}]
  %s3 = inlined_call_operand.vmem [shape: f32[1,16], index: 3, kind: input, shape index: {}]
  %s4 = inlined_call_operand.hbm [shape: f32[8,16], index: 4, kind: output, shape index: {}]
  %s5 = sld [smem:[#allocation0]]
  $region26: #{fe_forward.1} parent=0
    _
  %s7 = ssub.s32 1, %s5
  %s8 = scalar_select 0, %s7, %s5
  $region1: #{fe_forward.1} parent=0
    #allocation2 [shape = 'u8[4096]{0}', space=vmem, size = 0x1000, scoped, tag = 'output window, operand 0, single buffered']
    #allocation3 [shape = 's32[1]{0}', space=sflag, size = 0x4, scoped, tag = 'scoped memory for fe_forward.1']
    %9 = vsyncpa [#allocation3], 0
    // Predicated region
    $region2: #{fe_forward.1} parent=1 // pred_check
      _
    $region3: #{fe_forward.1} parent=1 // pred_check_branch
      %11 = sbr.rel (0) target = $region5
    $region4: #{fe_forward.1} parent=1 // pred_region
      _
    $region5: #{fe_forward.1} parent=1 // pred_fallthru
      _
    // Predicated region
    $region6: #{fe_forward.1} parent=1 // pred_check
      _
    $region7: #{fe_forward.1} parent=1 // pred_check_branch
      %13 = sbr.rel (0) target = $region9
    $region8: #{fe_forward.1} parent=1 // pred_region
      _
    $region9: #{fe_forward.1} parent=1 // pred_fallthru
      _
    // Predicated region
    $region10: #{fe_forward.1} parent=1 // pred_check
      _
    $region11: #{fe_forward.1} parent=1 // pred_check_branch
      %15 = sbr.rel (0) target = $region13
    $region12: #{fe_forward.1} parent=1 // pred_region
      _
    $region13: #{fe_forward.1} parent=1 // pred_fallthru
      _
    // Predicated region
    $region14: #{fe_forward.1} parent=1 // pred_check
      _
    $region15: #{fe_forward.1} parent=1 // pred_check_branch
      %17 = sbr.rel (0) target = $region17
    $region16: #{fe_forward.1} parent=1 // pred_region
      _
    $region17: #{fe_forward.1} parent=1 // pred_fallthru
      _
    %v18 = vld [vmem:[%s0] sm:$0xff]
    %v19 = vld [vmem:[%s1] sm:$0xff]
    %v20 = vld [vmem:[%s1 + $0x8] sm:$0xff]
    %v21 = vld [vmem:[%s1 + $0x10] sm:$0xff]
    %v22 = vld [vmem:[%s1 + $0x18] sm:$0xff]
    %v23 = vld [vmem:[%s1 + $0x20] sm:$0x7]
    %v24 = vld [vmem:[%s1 + $0x28] sm:$0x7]
    %v25 = vld [vmem:[%s1 + $0x30] sm:$0x7]
    %v26 = vld [vmem:[%s1 + $0x38] sm:$0x7]
    %vm27 = vcmask 89088
    %v29 = vsel %vm27, %v18, 0
    %vm31 = vcmask 1042432
    %v33 = vsel %vm31, %v23, 0
    %v36 = vsel %vm31, %v24, 0
    %v39 = vsel %vm31, %v25, 0
    %v42 = vsel %vm31, %v26, 0
    %44 = vmatprep.subr.mxu0 %v20
    %45 = vmatpush1.msra.mxu0 %v19
    %46 = vmatprep.subr.mxu0 %v36
    %47 = vmatpush1.msra.mxu0 %v33
    %48 = vmatprep.subr.mxu0 0.0
    %49 = vmatpush1.msra.mxu0 0.0
    %50 = vmatprep.subr.mxu0 0.0
    %51 = vmatpush1.msra.mxu0 0.0
    %52 = vmatprep.subr.mxu0 0.0
    %53 = vmatpush1.msra.mxu0 0.0
    %54 = vmatprep.subr.mxu0 0.0
    %55 = vmatpush1.msra.mxu0 0.0
    %56 = vmatprep.subr.mxu0 0.0
    %57 = vmatpush1.msra.mxu0 0.0
    %58 = vmatprep.subr.mxu0 0.0
    %59 = vmatpush1.msra.mxu0 0.0
    %60 = vmatprep.subr.mxu0 0.0
    %61 = vmatpush1.msra.mxu0 0.0
    %62 = vmatprep.subr.mxu0 0.0
    %63 = vmatpush1.msra.mxu0 0.0
    %64 = vmatprep.subr.mxu0 0.0
    %65 = vmatpush1.msra.mxu0 0.0
    %66 = vmatprep.subr.mxu0 0.0
    %67 = vmatpush1.msra.mxu0 0.0
    %68 = vmatprep.subr.mxu0 0.0
    %69 = vmatpush1.msra.mxu0 0.0
    %70 = vmatprep.subr.mxu0 0.0
    %71 = vmatpush1.msra.mxu0 0.0
    %72 = vmatprep.subr.mxu0 0.0
    %73 = vmatpush1.msra.mxu0 0.0
    %74 = vmatprep.subr.mxu0 0.0
    %75 = vmatpush1.msra.mxu0 0.0
    %76 = vmatprep.subr.mxu0 0.0
    %77 = vmatpush1.msra.mxu0 0.0
    %78 = vmatprep.subr.mxu0 0.0
    %79 = vmatpush1.msra.mxu0 0.0
    %80 = vmatprep.subr.mxu0 0.0
    %81 = vmatpush1.msra.mxu0 0.0
    %82 = vmatprep.subr.mxu0 0.0
    %83 = vmatpush1.msra.mxu0 0.0
    %84 = vmatprep.subr.mxu0 0.0
    %85 = vmatpush1.msra.mxu0 0.0
    %86 = vmatprep.subr.mxu0 0.0
    %87 = vmatpush1.msra.mxu0 0.0
    %88 = vmatprep.subr.mxu0 0.0
    %89 = vmatpush1.msra.mxu0 0.0
    %90 = vmatprep.subr.mxu0 0.0
    %91 = vmatpush1.msra.mxu0 0.0
    %92 = vmatprep.subr.mxu0 0.0
    %93 = vmatpush1.msra.mxu0 0.0
    %94 = vmatprep.subr.mxu0 0.0
    %95 = vmatpush1.msra.mxu0 0.0
    %96 = vmatprep.subr.mxu0 0.0
    %97 = vmatpush1.msra.mxu0 0.0
    %98 = vmatprep.subr.mxu0 0.0
    %99 = vmatpush1.msra.mxu0 0.0
    %100 = vmatprep.subr.mxu0 0.0
    %101 = vmatpush1.msra.mxu0 0.0
    %102 = vmatprep.subr.mxu0 0.0
    %103 = vmatpush1.msra.mxu0 0.0
    %104 = vmatprep.subr.mxu0 0.0
    %105 = vmatpush1.msra.mxu0 0.0
    %106 = vmatprep.subr.mxu0 0.0
    %107 = vmatpush1.msra.mxu0 0.0
    %108 = vmatprep.mubr.f32.mxu0 0.0
    %109 = vmatmul.mubr.f32.gmra.mrb[0].mxu0 %v29
    %v110 = vpop.f32.mrb[0].mxu0
    %v111 = vadd.f32 0.0, %v110
    %v112 = vpop.f32.mrb[0].mxu0
    %v113 = vadd.f32 0.0, %v112
    %114 = vdwg.mxu0
    %115 = vmatprep.subr.mxu0 %v22
    %116 = vmatpush1.msra.mxu0 %v21
    %117 = vmatprep.subr.mxu0 %v42
    %118 = vmatpush1.msra.mxu0 %v39
    %119 = vmatprep.subr.mxu0 0.0
    %120 = vmatpush1.msra.mxu0 0.0
    %121 = vmatprep.subr.mxu0 0.0
    %122 = vmatpush1.msra.mxu0 0.0
    %123 = vmatprep.subr.mxu0 0.0
    %124 = vmatpush1.msra.mxu0 0.0
    %125 = vmatprep.subr.mxu0 0.0
    %126 = vmatpush1.msra.mxu0 0.0
    %127 = vmatprep.subr.mxu0 0.0
    %128 = vmatpush1.msra.mxu0 0.0
    %129 = vmatprep.subr.mxu0 0.0
    %130 = vmatpush1.msra.mxu0 0.0
    %131 = vmatprep.subr.mxu0 0.0
    %132 = vmatpush1.msra.mxu0 0.0
    %133 = vmatprep.subr.mxu0 0.0
    %134 = vmatpush1.msra.mxu0 0.0
    %135 = vmatprep.subr.mxu0 0.0
    %136 = vmatpush1.msra.mxu0 0.0
    %137 = vmatprep.subr.mxu0 0.0
    %138 = vmatpush1.msra.mxu0 0.0
    %139 = vmatprep.subr.mxu0 0.0
    %140 = vmatpush1.msra.mxu0 0.0
    %141 = vmatprep.subr.mxu0 0.0
    %142 = vmatpush1.msra.mxu0 0.0
    %143 = vmatprep.subr.mxu0 0.0
    %144 = vmatpush1.msra.mxu0 0.0
    %145 = vmatprep.subr.mxu0 0.0
    %146 = vmatpush1.msra.mxu0 0.0
    %147 = vmatprep.subr.mxu0 0.0
    %148 = vmatpush1.msra.mxu0 0.0
    %149 = vmatprep.subr.mxu0 0.0
    %150 = vmatpush1.msra.mxu0 0.0
    %151 = vmatprep.subr.mxu0 0.0
    %152 = vmatpush1.msra.mxu0 0.0
    %153 = vmatprep.subr.mxu0 0.0
    %154 = vmatpush1.msra.mxu0 0.0
    %155 = vmatprep.subr.mxu0 0.0
    %156 = vmatpush1.msra.mxu0 0.0
    %157 = vmatprep.subr.mxu0 0.0
    %158 = vmatpush1.msra.mxu0 0.0
    %159 = vmatprep.subr.mxu0 0.0
    %160 = vmatpush1.msra.mxu0 0.0
    %161 = vmatprep.subr.mxu0 0.0
    %162 = vmatpush1.msra.mxu0 0.0
    %163 = vmatprep.subr.mxu0 0.0
    %164 = vmatpush1.msra.mxu0 0.0
    %165 = vmatprep.subr.mxu0 0.0
    %166 = vmatpush1.msra.mxu0 0.0
    %167 = vmatprep.subr.mxu0 0.0
    %168 = vmatpush1.msra.mxu0 0.0
    %169 = vmatprep.subr.mxu0 0.0
    %170 = vmatpush1.msra.mxu0 0.0
    %171 = vmatprep.subr.mxu0 0.0
    %172 = vmatpush1.msra.mxu0 0.0
    %173 = vmatprep.subr.mxu0 0.0
    %174 = vmatpush1.msra.mxu0 0.0
    %175 = vmatprep.subr.mxu0 0.0
    %176 = vmatpush1.msra.mxu0 0.0
    %177 = vmatprep.subr.mxu0 0.0
    %178 = vmatpush1.msra.mxu0 0.0
    %179 = vmatprep.mubr.f32.mxu0 0.0
    %180 = vmatmul.mubr.f32.gmra.mrb[0].mxu0 %v29
    %v181 = vpop.f32.mrb[0].mxu0
    %v182 = vadd.f32 0.0, %v181
    %v183 = vpop.f32.mrb[0].mxu0
    %v184 = vadd.f32 0.0, %v183
    %185 = vdwg.mxu0
    %v186 = vmul.f32 %v111, 0.01
    %v187 = vmul.f32 %v113, 0.01
    %v188 = vmul.f32 %v182, 0.01
    %v189 = vmul.f32 %v184, 0.01
    %v190 = vmax.f32 %v111, %v186
    %v191 = vmax.f32 %v113, %v187
    %v192 = vmax.f32 %v182, %v188
    %v193 = vmax.f32 %v184, %v189
    %v194 = vld [vmem:[%s2] sm:$0xff]
    %v195 = vld [vmem:[%s2 + $0x8] sm:$0xff]
    %v196 = vld [vmem:[%s2 + $0x10] sm:$0xff]
    %v197 = vld [vmem:[%s2 + $0x18] sm:$0xff]
    %v198 = vld [vmem:[%s2 + $0x20] sm:$0xff]
    %v199 = vld [vmem:[%s2 + $0x28] sm:$0xff]
    %v200 = vld [vmem:[%s2 + $0x30] sm:$0xff]
    %v201 = vld [vmem:[%s2 + $0x38] sm:$0xff]
    %v202 = vld [vmem:[%s2 + $0x40] sm:$0xff]
    %v203 = vld [vmem:[%s2 + $0x48] sm:$0xff]
    %v204 = vld [vmem:[%s2 + $0x50] sm:$0xff]
    %v205 = vld [vmem:[%s2 + $0x58] sm:$0xff]
    %v206 = vld [vmem:[%s2 + $0x60] sm:$0xff]
    %v207 = vld [vmem:[%s2 + $0x68] sm:$0xff]
    %v208 = vld [vmem:[%s2 + $0x70] sm:$0xff]
    %v209 = vld [vmem:[%s2 + $0x78] sm:$0xff]
    %v210 = vld [vmem:[%s2 + $0x80] sm:$0xff]
    %v211 = vld [vmem:[%s2 + $0x88] sm:$0xff]
    %v212 = vld [vmem:[%s2 + $0x90] sm:$0xff]
    %v213 = vld [vmem:[%s2 + $0x98] sm:$0xff]
    %v214 = vld [vmem:[%s2 + $0xa0] sm:$0xff]
    %v215 = vld [vmem:[%s2 + $0xa8] sm:$0xff]
    %v216 = vld [vmem:[%s2 + $0xb0] sm:$0xff]
    %v217 = vld [vmem:[%s2 + $0xb8] sm:$0xff]
    %v218 = vld [vmem:[%s2 + $0xc0] sm:$0xff]
    %v219 = vld [vmem:[%s2 + $0xc8] sm:$0xff]
    %v220 = vld [vmem:[%s2 + $0xd0] sm:$0xff]
    %v221 = vld [vmem:[%s2 + $0xd8] sm:$0xff]
    %v222 = vld [vmem:[%s2 + $0xe0] sm:$0xff]
    %v223 = vld [vmem:[%s2 + $0xe8] sm:$0xff]
    %v224 = vld [vmem:[%s2 + $0xf0] sm:$0xff]
    %v225 = vld [vmem:[%s2 + $0xf8] sm:$0xff]
    %v226 = vld [vmem:[%s2 + $0x100] sm:$0xff]
    %v227 = vld [vmem:[%s2 + $0x108] sm:$0xff]
    %v228 = vld [vmem:[%s2 + $0x110] sm:$0xff]
    %v229 = vld [vmem:[%s2 + $0x118] sm:$0xff]
    %v230 = vld [vmem:[%s2 + $0x120] sm:$0xff]
    %v231 = vld [vmem:[%s2 + $0x128] sm:$0xff]
    %v232 = vld [vmem:[%s2 + $0x130] sm:$0xff]
    %v233 = vld [vmem:[%s2 + $0x138] sm:$0xff]
    %v234 = vld [vmem:[%s2 + $0x140] sm:$0xff]
    %v235 = vld [vmem:[%s2 + $0x148] sm:$0xff]
    %v236 = vld [vmem:[%s2 + $0x150] sm:$0xff]
    %v237 = vld [vmem:[%s2 + $0x158] sm:$0xff]
    %v238 = vld [vmem:[%s2 + $0x160] sm:$0xff]
    %v239 = vld [vmem:[%s2 + $0x168] sm:$0xff]
    %v240 = vld [vmem:[%s2 + $0x170] sm:$0xff]
    %v241 = vld [vmem:[%s2 + $0x178] sm:$0xff]
    %v242 = vld [vmem:[%s2 + $0x180] sm:$0xff]
    %v243 = vld [vmem:[%s2 + $0x188] sm:$0xff]
    %v244 = vld [vmem:[%s2 + $0x190] sm:$0xff]
    %v245 = vld [vmem:[%s2 + $0x198] sm:$0xff]
    %v246 = vld [vmem:[%s2 + $0x1a0] sm:$0xff]
    %v247 = vld [vmem:[%s2 + $0x1a8] sm:$0xff]
    %v248 = vld [vmem:[%s2 + $0x1b0] sm:$0xff]
    %v249 = vld [vmem:[%s2 + $0x1b8] sm:$0xff]
    %v250 = vld [vmem:[%s2 + $0x1c0] sm:$0xff]
    %v251 = vld [vmem:[%s2 + $0x1c8] sm:$0xff]
    %v252 = vld [vmem:[%s2 + $0x1d0] sm:$0xff]
    %v253 = vld [vmem:[%s2 + $0x1d8] sm:$0xff]
    %v254 = vld [vmem:[%s2 + $0x1e0] sm:$0xff]
    %v255 = vld [vmem:[%s2 + $0x1e8] sm:$0xff]
    %v256 = vld [vmem:[%s2 + $0x1f0] sm:$0xff]
    %v257 = vld [vmem:[%s2 + $0x1f8] sm:$0xff]
    %v258 = vld [vmem:[%s3] sm:$0x1]
    %v260 = vlaneseq
    %v261 = vshrl.u32 %v260, 7
    %v262 = vsub.s32 0, %v261
    %v263 = vrot.slane %v258, %v262
    %265 = vmatprep.subr.mxu0 0.0
    %266 = vmatpush1.msra.mxu0 %v194
    %267 = vmatprep.subr.mxu0 0.0
    %268 = vmatpush1.msra.mxu0 %v195
    %269 = vmatprep.subr.mxu0 0.0
    %270 = vmatpush1.msra.mxu0 %v196
    %271 = vmatprep.subr.mxu0 0.0
    %272 = vmatpush1.msra.mxu0 %v197
    %273 = vmatprep.subr.mxu0 0.0
    %274 = vmatpush1.msra.mxu0 %v198
    %275 = vmatprep.subr.mxu0 0.0
    %276 = vmatpush1.msra.mxu0 %v199
    %277 = vmatprep.subr.mxu0 0.0
    %278 = vmatpush1.msra.mxu0 %v200
    %279 = vmatprep.subr.mxu0 0.0
    %280 = vmatpush1.msra.mxu0 %v201
    %281 = vmatprep.subr.mxu0 0.0
    %282 = vmatpush1.msra.mxu0 %v202
    %283 = vmatprep.subr.mxu0 0.0
    %284 = vmatpush1.msra.mxu0 %v203
    %285 = vmatprep.subr.mxu0 0.0
    %286 = vmatpush1.msra.mxu0 %v204
    %287 = vmatprep.subr.mxu0 0.0
    %288 = vmatpush1.msra.mxu0 %v205
    %289 = vmatprep.subr.mxu0 0.0
    %290 = vmatpush1.msra.mxu0 %v206
    %291 = vmatprep.subr.mxu0 0.0
    %292 = vmatpush1.msra.mxu0 %v207
    %293 = vmatprep.subr.mxu0 0.0
    %294 = vmatpush1.msra.mxu0 %v208
    %295 = vmatprep.subr.mxu0 0.0
    %296 = vmatpush1.msra.mxu0 %v209
    %297 = vmatprep.subr.mxu0 0.0
    %298 = vmatpush1.msra.mxu0 %v210
    %299 = vmatprep.subr.mxu0 0.0
    %300 = vmatpush1.msra.mxu0 %v211
    %301 = vmatprep.subr.mxu0 0.0
    %302 = vmatpush1.msra.mxu0 %v212
    %303 = vmatprep.subr.mxu0 0.0
    %304 = vmatpush1.msra.mxu0 %v213
    %305 = vmatprep.subr.mxu0 0.0
    %306 = vmatpush1.msra.mxu0 %v214
    %307 = vmatprep.subr.mxu0 0.0
    %308 = vmatpush1.msra.mxu0 %v215
    %309 = vmatprep.subr.mxu0 0.0
    %310 = vmatpush1.msra.mxu0 %v216
    %311 = vmatprep.subr.mxu0 0.0
    %312 = vmatpush1.msra.mxu0 %v217
    %313 = vmatprep.subr.mxu0 0.0
    %314 = vmatpush1.msra.mxu0 %v218
    %315 = vmatprep.subr.mxu0 0.0
    %316 = vmatpush1.msra.mxu0 %v219
    %317 = vmatprep.subr.mxu0 0.0
    %318 = vmatpush1.msra.mxu0 %v220
    %319 = vmatprep.subr.mxu0 0.0
    %320 = vmatpush1.msra.mxu0 %v221
    %321 = vmatprep.subr.mxu0 0.0
    %322 = vmatpush1.msra.mxu0 %v222
    %323 = vmatprep.subr.mxu0 0.0
    %324 = vmatpush1.msra.mxu0 %v223
    %325 = vmatprep.subr.mxu0 0.0
    %326 = vmatpush1.msra.mxu0 %v224
    %327 = vmatprep.subr.mxu0 0.0
    %328 = vmatpush1.msra.mxu0 %v225
    %329 = vmatprep.mubr.f32.mxu0 %v191
    %330 = vmatmul.mubr.f32.gmra.mrb[0].mxu0 %v190
    %v331 = vpop.f32.mrb[0].mxu0
    %v332 = vadd.f32 %v263, %v331
    %v333 = vpop.f32.mrb[0].mxu0
    %334 = vdwg.mxu0
    %335 = vmatprep.subr.mxu0 0.0
    %336 = vmatpush1.msra.mxu0 %v226
    %337 = vmatprep.subr.mxu0 0.0
    %338 = vmatpush1.msra.mxu0 %v227
    %339 = vmatprep.subr.mxu0 0.0
    %340 = vmatpush1.msra.mxu0 %v228
    %341 = vmatprep.subr.mxu0 0.0
    %342 = vmatpush1.msra.mxu0 %v229
    %343 = vmatprep.subr.mxu0 0.0
    %344 = vmatpush1.msra.mxu0 %v230
    %345 = vmatprep.subr.mxu0 0.0
    %346 = vmatpush1.msra.mxu0 %v231
    %347 = vmatprep.subr.mxu0 0.0
    %348 = vmatpush1.msra.mxu0 %v232
    %349 = vmatprep.subr.mxu0 0.0
    %350 = vmatpush1.msra.mxu0 %v233
    %351 = vmatprep.subr.mxu0 0.0
    %352 = vmatpush1.msra.mxu0 %v234
    %353 = vmatprep.subr.mxu0 0.0
    %354 = vmatpush1.msra.mxu0 %v235
    %355 = vmatprep.subr.mxu0 0.0
    %356 = vmatpush1.msra.mxu0 %v236
    %357 = vmatprep.subr.mxu0 0.0
    %358 = vmatpush1.msra.mxu0 %v237
    %359 = vmatprep.subr.mxu0 0.0
    %360 = vmatpush1.msra.mxu0 %v238
    %361 = vmatprep.subr.mxu0 0.0
    %362 = vmatpush1.msra.mxu0 %v239
    %363 = vmatprep.subr.mxu0 0.0
    %364 = vmatpush1.msra.mxu0 %v240
    %365 = vmatprep.subr.mxu0 0.0
    %366 = vmatpush1.msra.mxu0 %v241
    %367 = vmatprep.subr.mxu0 0.0
    %368 = vmatpush1.msra.mxu0 %v242
    %369 = vmatprep.subr.mxu0 0.0
    %370 = vmatpush1.msra.mxu0 %v243
    %371 = vmatprep.subr.mxu0 0.0
    %372 = vmatpush1.msra.mxu0 %v244
    %373 = vmatprep.subr.mxu0 0.0
    %374 = vmatpush1.msra.mxu0 %v245
    %375 = vmatprep.subr.mxu0 0.0
    %376 = vmatpush1.msra.mxu0 %v246
    %377 = vmatprep.subr.mxu0 0.0
    %378 = vmatpush1.msra.mxu0 %v247
    %379 = vmatprep.subr.mxu0 0.0
    %380 = vmatpush1.msra.mxu0 %v248
    %381 = vmatprep.subr.mxu0 0.0
    %382 = vmatpush1.msra.mxu0 %v249
    %383 = vmatprep.subr.mxu0 0.0
    %384 = vmatpush1.msra.mxu0 %v250
    %385 = vmatprep.subr.mxu0 0.0
    %386 = vmatpush1.msra.mxu0 %v251
    %387 = vmatprep.subr.mxu0 0.0
    %388 = vmatpush1.msra.mxu0 %v252
    %389 = vmatprep.subr.mxu0 0.0
    %390 = vmatpush1.msra.mxu0 %v253
    %391 = vmatprep.subr.mxu0 0.0
    %392 = vmatpush1.msra.mxu0 %v254
    %393 = vmatprep.subr.mxu0 0.0
    %394 = vmatpush1.msra.mxu0 %v255
    %395 = vmatprep.subr.mxu0 0.0
    %396 = vmatpush1.msra.mxu0 %v256
    %397 = vmatprep.subr.mxu0 0.0
    %398 = vmatpush1.msra.mxu0 %v257
    %399 = vmatprep.mubr.f32.mxu0 %v193
    %400 = vmatmul.mubr.f32.gmra.mrb[0].mxu0 %v192
    %v401 = vpop.f32.mrb[0].mxu0
    %v402 = vadd.f32 %v332, %v401
    %v403 = vpop.f32.mrb[0].mxu0
    %404 = vdwg.mxu0
    %v405 = vmul.f32 %v402, 0.01
    %v406 = vmax.f32 %v402, %v405
    %vm407 = vcmask 130048
    %408 = vst.msk [vmem:[#allocation2] sm:$0xff] %vm407, %v406
    // Predicated region
    $region18: #{fe_forward.1} parent=1 // pred_check
      _
    $region19: #{fe_forward.1} parent=1 // pred_check_branch
      %410 = sbr.rel (0) target = $region21
    $region20: #{fe_forward.1} parent=1 // pred_region
      %s412 = ssub.s32 128, 128
      %413 = vsyncadd [#allocation3], %s412
      %s415 = sshll.u32 [#allocation2], 4
      %s416 = int_to_ptr.vmem [resolvable:$true] %s415
      %418 = dma.vmem_to_hbm [thread:$0]  %s416, 128, %s4, [#allocation3]
    $region21: #{fe_forward.1} parent=1 // pred_fallthru
      _
    // Predicated region
    $region22: #{fe_forward.1} parent=1 // pred_check
      _
    $region23: #{fe_forward.1} parent=1 // pred_check_branch
      %420 = sbr.rel (0) target = $region25
    $region24: #{fe_forward.1} parent=1 // pred_region
      %421 = dma.done [#allocation3], 128
    $region25: #{fe_forward.1} parent=1 // pred_fallthru
      _
    %422 = vsyncpa [#allocation3], 1

</llo_original>
